<compile_context>
chip_gen: v5e
topology: v5e:2x2
jax: 0.10.0
libtpu: 0.0.40
codegen_flags: <defaults>
</compile_context>

<pallas_src>
import functools

import jax
import jax.numpy as jnp
from jax.experimental import pallas as pl
from jax.experimental.pallas import tpu as pltpu


# ---------------------------------------------------------------------------
# Tiled matmul + bias kernel (input projection and FC head).
# Single full-K reduction step: no k grid axis, no accumulator scratch.
# ---------------------------------------------------------------------------
def _matmul_bias_kernel(a_ref, b_ref, bias_ref, o_ref):
    o_ref[...] = (
        jnp.dot(a_ref[...], b_ref[...], preferred_element_type=jnp.float32)
        + bias_ref[...]
    ).astype(o_ref.dtype)


def matmul_bias_pallas(a, w_t, bias_row, *, tm=256, tn=256):
    """Computes a @ w_t + bias_row.

    a        : (M, K) activations.
    w_t      : (K, N) weight, already transposed at init (no per-call transpose).
    bias_row : (1, N) float32 bias row.

    Output is the exact (M, N) shape (no pad-then-slice of the result).
    Tiles: tm multiple of 8, tn multiple of 128 (v5e would prefer 128-wide
    panels; 256 suits v6e/v7x).  Partial edge tiles rely on Pallas masked
    loads/stores, which is safe because output[m, n] depends only on row m of
    `a` and column n of `w_t`.
    """
    if a.dtype != w_t.dtype:
        a = a.astype(w_t.dtype)
    M, K = a.shape
    K2, N = w_t.shape
    assert K == K2, (a.shape, w_t.shape)
    assert bias_row.shape == (1, N), bias_row.shape

    # M tile: multiple of 8, or the full (possibly unaligned) dim.
    if M < 8 or M % 8 != 0:
        tm_ = M
    else:
        tm_ = max(8, (min(tm, M) // 8) * 8)
    # N tile: multiple of 128, or the full dim when N < 128.
    if N < 128:
        tn_ = N
    else:
        tn_ = max(128, (min(tn, N) // 128) * 128)

    grid = (pl.cdiv(M, tm_), pl.cdiv(N, tn_))

    # Explicit VMEM budget (double-buffered input/output blocks + margin),
    # clamped so it stays safe on v5e (16 MiB scoped default) and leaves
    # headroom on v7x (64 MiB physical VMEM).
    itemsize = max(jnp.dtype(a.dtype).itemsize, jnp.dtype(w_t.dtype).itemsize)
    need = 2 * (tm_ * K + K * tn_ + tn_) * itemsize + 2 * tm_ * tn_ * 4
    vmem_limit = int(min(max(4 * need, 16 * 2**20), 48 * 2**20))

    return pl.pallas_call(
        _matmul_bias_kernel,
        out_shape=jax.ShapeDtypeStruct((M, N), jnp.float32),
        grid_spec=pltpu.PrefetchScalarGridSpec(
            num_scalar_prefetch=0,
            grid=grid,
            in_specs=[
                pl.BlockSpec((tm_, K), lambda i, j: (i, 0)),
                pl.BlockSpec((K, tn_), lambda i, j: (0, j)),
                pl.BlockSpec((1, tn_), lambda i, j: (0, j)),
            ],
            out_specs=pl.BlockSpec((tm_, tn_), lambda i, j: (i, j)),
        ),
        compiler_params=pltpu.CompilerParams(
            dimension_semantics=("parallel", "parallel"),
            vmem_limit_bytes=vmem_limit),
    )(a, w_t, bias_row)


# ---------------------------------------------------------------------------
# Sequential LSTM recurrence kernel (time-chunked, state carried in VMEM).
# ---------------------------------------------------------------------------
def _lstm_recurrence_kernel(gx_ref, whh_ref, h_out_ref, h_sc, c_sc, h_chunk_sc,
                            *, steps, batch, hidden):
    """One grid iteration == `steps` LSTM time steps.

    gx_ref     : (steps*batch, 4H)  precomputed x @ W_ih^T + bias, time-major rows
    whh_ref    : (H, 4H)            loop-invariant weight, whole-array VMEM resident
    h_out_ref  : (steps*batch, H)   hidden states for this chunk, time-major rows
    h_sc, c_sc : (batch, H)         VMEM scratch carrying state across grid steps
    h_chunk_sc : (steps*batch, H)   chunk staging buffer (one bulk store at the end)
    """
    @pl.when(pl.program_id(0) == 0)
    def _():
        h_sc[...] = jnp.zeros_like(h_sc)
        c_sc[...] = jnp.zeros_like(c_sc)

    H = hidden
    h = h_sc[...]
    c = c_sc[...]
    for tt in range(steps):                       # static unroll over the chunk
        r0 = tt * batch
        # Per-step ref slice (not a whole-chunk hoisted load) and whh_ref[...]
        # fed straight to the dot: keeps vreg live ranges local to one step.
        z = gx_ref[pl.ds(r0, batch), :] + jnp.dot(
            h, whh_ref[...], preferred_element_type=jnp.float32)   # (batch, 4H)
        i_g = jax.nn.sigmoid(z[:, 0 * H:1 * H])
        f_g = jax.nn.sigmoid(z[:, 1 * H:2 * H])
        g_g = jnp.tanh(z[:, 2 * H:3 * H])
        o_g = jax.nn.sigmoid(z[:, 3 * H:4 * H])
        c = f_g * c + i_g * g_g
        h = o_g * jnp.tanh(c)
        h_chunk_sc[pl.ds(r0, batch), :] = h
    # One clean, unmasked, whole-block output store per chunk.
    h_out_ref[...] = h_chunk_sc[...].astype(h_out_ref.dtype)
    h_sc[...] = h
    c_sc[...] = c


def lstm_recurrence_pallas(gates_tm, whh_t, *, batch, tc=16):
    """gates_tm: (T*B, 4H) time-major rows (row = t*B + b). Returns h (T*B, H).

    tc = time-chunk size; larger chunks amortize the ~600-cycle per-grid-step
    overhead (cap lower on v7x if the (Tc*B, 4H) block grows against 64 MiB VMEM).
    """
    TB, H4 = gates_tm.shape
    B = batch
    T = TB // B
    H = whh_t.shape[0]
    assert H4 == 4 * H and TB == T * B

    Tc = max(1, min(tc, T))
    while (Tc * B) % 8 != 0:          # keep the block sublane dim 8-aligned
        Tc += 1
    Tp = pl.cdiv(T, Tc) * Tc
    if Tp != T:
        # NOTE: trailing padded steps run on zero gates and DO update the
        # carried (h, c).  This is harmless because padding is trailing and
        # the padded outputs are sliced off below -- but the final (h, c)
        # must never be returned from this function.
        gates_tm = jnp.pad(gates_tm, ((0, (Tp - T) * B), (0, 0)))
    rows = Tc * B

    kernel = functools.partial(_lstm_recurrence_kernel,
                               steps=Tc, batch=B, hidden=H)
    h_tm = pl.pallas_call(
        kernel,
        out_shape=jax.ShapeDtypeStruct((Tp * B, H), jnp.float32),
        grid_spec=pltpu.PrefetchScalarGridSpec(
            num_scalar_prefetch=0,
            grid=(Tp // Tc,),
            in_specs=[
                pl.BlockSpec((rows, H4), lambda t: (t, 0)),
                # Loop-invariant W_hh: whole-array, single-buffered VMEM
                # residency (fetched once; no wasted double buffer).
                pl.BlockSpec(memory_space=pltpu.MemorySpace.VMEM),
            ],
            out_specs=pl.BlockSpec((rows, H), lambda t: (t, 0)),
            scratch_shapes=[
                pltpu.VMEM((B, H), jnp.float32),     # carried h
                pltpu.VMEM((B, H), jnp.float32),     # carried c
                pltpu.VMEM((rows, H), jnp.float32),  # chunk staging buffer
            ],
        ),
        compiler_params=pltpu.CompilerParams(
            # MUST stay sequential: (h, c) is carried across grid iterations
            # in VMEM scratch.  Do not mark this axis "parallel".
            dimension_semantics=("arbitrary",)),
    )(gates_tm, whh_t)
    if Tp != T:
        h_tm = h_tm[:T * B, :]
    return h_tm


# ---------------------------------------------------------------------------
# Parameters + forward (matches DecoderRNN.forward).
# ---------------------------------------------------------------------------
class DecoderRNNParams:
    """Deterministic parameter container mirroring the PyTorch module shapes.

    Kernel-ready weights (pre-transposed, bias fused/row-shaped, optionally
    bf16 for the big MXU matmuls) are prepared ONCE here, not per forward call.
    """

    def __init__(self, key, embed_size, hidden_size, vocab_size,
                 matmul_dtype=jnp.float32):
        k = jax.random.split(key, 8)
        s = 1.0 / jnp.sqrt(hidden_size)
        # --- torch-layout parameters (also used by the pure-JAX reference) ---
        self.embedding = jax.random.normal(
            k[0], (vocab_size, embed_size), jnp.float32)             # nn.Embedding
        self.w_ih = jax.random.uniform(
            k[1], (4 * hidden_size, embed_size), jnp.float32, -s, s)  # lstm.weight_ih_l0
        self.w_hh = jax.random.uniform(
            k[2], (4 * hidden_size, hidden_size), jnp.float32, -s, s)  # lstm.weight_hh_l0
        self.b_ih = jax.random.uniform(
            k[3], (4 * hidden_size,), jnp.float32, -s, s)
        self.b_hh = jax.random.uniform(
            k[4], (4 * hidden_size,), jnp.float32, -s, s)
        self.w_fc = jax.random.uniform(
            k[5], (vocab_size, hidden_size), jnp.float32, -s, s)      # fc.weight
        self.b_fc = jax.random.uniform(
            k[6], (vocab_size,), jnp.float32, -s, s)                  # fc.bias

        # --- kernel-ready, prepared once (hoisted out of the forward pass) ---
        # For production, pass matmul_dtype=jnp.bfloat16: halves HBM weight
        # streaming on the FC head and doubles MXU throughput on v6e/v7x while
        # keeping f32 accumulation and f32 gate math.
        self.w_ih_t = jnp.transpose(self.w_ih).astype(matmul_dtype)   # (E, 4H)
        self.w_fc_t = jnp.transpose(self.w_fc).astype(matmul_dtype)   # (H, V)
        self.w_hh_t = jnp.transpose(self.w_hh).astype(jnp.float32)    # (H, 4H), f32 gate path
        self.bias_ihhh = (self.b_ih + self.b_hh).reshape(1, -1).astype(jnp.float32)
        self.b_fc_row = self.b_fc.reshape(1, -1).astype(jnp.float32)
        self.embed_size = embed_size
        self.hidden_size = hidden_size
        self.vocab_size = vocab_size


def decoder_rnn_forward(params, features, captions, *, tc=16):
    """features: (B, E) f32; captions: (B, S) int32. Returns (B, S, V) logits."""
    caps = captions[:, :-1]                                         # (B, S-1)
    # TODO(synk): nn.Embedding gather + concat kept as plain-JAX glue
    # (data-dependent gather over tiny tensors).
    emb = jnp.take(params.embedding, caps, axis=0)                  # (B, S-1, E)
    inputs = jnp.concatenate(
        [features[:, None, :].astype(jnp.float32), emb], axis=1)    # (B, T, E)
    B, T, E = inputs.shape
    H = params.hidden_size
    V = params.vocab_size

    # (1) Input projection hoisted out of the recurrence: one tiled, parallel
    #     MXU matmul over all T*B rows (time-major rows so the recurrence
    #     reads a contiguous (B, 4H) slab per step; only this small E-sized
    #     tensor is reordered, never the large logits tensor).
    x_tm = jnp.transpose(inputs, (1, 0, 2)).reshape(T * B, E)
    gates_tm = matmul_bias_pallas(x_tm, params.w_ih_t, params.bias_ihhh)   # (T*B, 4H)

    # (2) Serial recurrence over time chunks; only h @ W_hh^T + gate math inside.
    h_tm = lstm_recurrence_pallas(gates_tm, params.w_hh_t, batch=B, tc=tc)  # (T*B, H)

    # (3) FC head as a tiled parallel matmul, batch-major rows so the large
    #     logits tensor lands directly in (B, T, V) order at its exact shape.
    h_bm = jnp.transpose(h_tm.reshape(T, B, H), (1, 0, 2)).reshape(B * T, H)
    logits = matmul_bias_pallas(h_bm, params.w_fc_t, params.b_fc_row)       # (B*T, V)
    return logits.reshape(B, T, V)


def _reference_forward(params, features, captions):
    """Pure-JAX reference (lax.scan LSTM) for correctness check."""
    caps = captions[:, :-1]
    emb = jnp.take(params.embedding, caps, axis=0)
    inputs = jnp.concatenate([features[:, None, :], emb], axis=1)   # (B, T, E)
    B, T, E = inputs.shape
    H = params.hidden_size

    def step(carry, x_t):
        h, c = carry
        z = (x_t @ params.w_ih.T + h @ params.w_hh.T
             + params.b_ih + params.b_hh)
        i = jax.nn.sigmoid(z[:, 0 * H:1 * H])
        f = jax.nn.sigmoid(z[:, 1 * H:2 * H])
        g = jnp.tanh(z[:, 2 * H:3 * H])
        o = jax.nn.sigmoid(z[:, 3 * H:4 * H])
        c = f * c + i * g
        h = o * jnp.tanh(c)
        return (h, c), h

    h0 = jnp.zeros((B, H), jnp.float32)
    c0 = jnp.zeros((B, H), jnp.float32)
    _, hs = jax.lax.scan(step, (h0, c0), jnp.transpose(inputs, (1, 0, 2)))
    hs = jnp.transpose(hs, (1, 0, 2))                               # (B, T, H)
    return hs @ params.w_fc.T + params.b_fc


if __name__ == "__main__":
    B = 2
    embed_size = 16
    hidden_size = 32
    vocab_size = 32
    seq = 8            # captions length S -> T = S time steps after concat

    key = jax.random.PRNGKey(0)
    kp, kf, kc = jax.random.split(key, 3)

    # f32 weights at demo shape so the result matches the f32 reference
    # bit-for-bit within tolerance; use matmul_dtype=jnp.bfloat16 in production.
    params = DecoderRNNParams(kp, embed_size, hidden_size, vocab_size,
                              matmul_dtype=jnp.float32)
    features = jax.random.normal(kf, (B, embed_size), jnp.float32)
    captions = jax.random.randint(kc, (B, seq), 0, vocab_size, jnp.int32)

    out = decoder_rnn_forward(params, features, captions)
    out = jax.block_until_ready(out)
    assert out.shape == (B, seq, vocab_size), out.shape

    ref = jax.block_until_ready(_reference_forward(params, features, captions))
    assert jnp.allclose(out, ref, rtol=1e-3, atol=1e-3), (
        float(jnp.max(jnp.abs(out - ref))))

    print("KERNEL_OK")
</pallas_src>

<mosaic_0001>
module attributes {stable_mosaic.version = 11 : i64} {
  func.func @_matmul_bias_kernel(%arg0: i32, %arg1: i32, %arg2: memref<16x16xf32, #tpu.memory_space<vmem>>, %arg3: memref<16x128xf32, #tpu.memory_space<vmem>>, %arg4: memref<1x128xf32, #tpu.memory_space<vmem>>, %arg5: memref<16x128xf32, #tpu.memory_space<vmem>>) attributes {dimension_semantics = [#tpu.dimension_semantics<parallel>, #tpu.dimension_semantics<parallel>], iteration_bounds = array<i64: 1, 1>, scalar_prefetch = 0 : i64, scratch_operands = 0 : i64, tpu.core_type = #tpu.core_type<tc>, window_params = [{transform_indices = @transform_0, window_bounds = array<i64: 16, 16>}, {transform_indices = @transform_1, window_bounds = array<i64: 16, 128>}, {transform_indices = @transform_2, window_bounds = array<i64: 1, 128>}, {transform_indices = @transform_3, window_bounds = array<i64: 16, 128>}]} {
    %c0 = arith.constant 0 : index
    %c0_0 = arith.constant 0 : index
    %0 = vector.load %arg2[%c0, %c0_0] : memref<16x16xf32, #tpu.memory_space<vmem>>, vector<16x16xf32>
    %c0_1 = arith.constant 0 : index
    %c0_2 = arith.constant 0 : index
    %1 = vector.load %arg3[%c0_1, %c0_2] : memref<16x128xf32, #tpu.memory_space<vmem>>, vector<16x128xf32>
    %cst = arith.constant dense<0.000000e+00> : vector<16x128xf32>
    %2 = tpu.matmul %0, %1, %cst {dimension_numbers = #tpu.dot_dimension_numbers<[1], [0], [0], [1], [0, 0, 1, 1], [], []>} : vector<16x16xf32>, vector<16x128xf32>, vector<16x128xf32> -> vector<16x128xf32>
    %c0_3 = arith.constant 0 : index
    %c0_4 = arith.constant 0 : index
    %3 = vector.load %arg4[%c0_3, %c0_4] : memref<1x128xf32, #tpu.memory_space<vmem>>, vector<1x128xf32>
    %4 = vector.broadcast %3 : vector<1x128xf32> to vector<16x128xf32>
    %5 = arith.addf %2, %4 : vector<16x128xf32>
    %c0_5 = arith.constant 0 : index
    %c0_6 = arith.constant 0 : index
    %6 = vector.load %arg5[%c0_5, %c0_6] : memref<16x128xf32, #tpu.memory_space<vmem>>, vector<16x128xf32>
    tpu.vector_store %arg5[%c0_5, %c0_6], %5 {strides = array<i32>} : memref<16x128xf32, #tpu.memory_space<vmem>>, vector<16x128xf32>,
    return
  }
  func.func @transform_0(%arg0: i32, %arg1: i32) -> (i32, i32) {
    %c0_i32 = arith.constant 0 : i32
    %c0_i32_0 = arith.constant 0 : i32
    return %arg0, %c0_i32 : i32, i32
  }
  func.func @transform_1(%arg0: i32, %arg1: i32) -> (i32, i32) {
    %c0_i32 = arith.constant 0 : i32
    %c0_i32_0 = arith.constant 0 : i32
    return %c0_i32, %arg1 : i32, i32
  }
  func.func @transform_2(%arg0: i32, %arg1: i32) -> (i32, i32) {
    %c0_i32 = arith.constant 0 : i32
    %c0_i32_0 = arith.constant 0 : i32
    return %c0_i32, %arg1 : i32, i32
  }
  func.func @transform_3(%arg0: i32, %arg1: i32) -> (i32, i32) {
    %c0_i32 = arith.constant 0 : i32
    return %arg0, %arg1 : i32, i32
  }
}

</mosaic_0001>

<llo_original>
// kernel: tpu_custom_call.1
$region0: #{tpu_custom_call.1}
  #allocation0 [shape = 'u32[]', space=smem, size = 0x4, offset = 0x4, fixed_abs, tag = 'smem constant byte address 0x4 - core index']
  #allocation1 [shape = 'u32[72,128]{1,0:T(1,128)}', space=vmem, size = 0x9000, scoped, tag = 'internal scratch']
  %s0 = inlined_call_operand.hbm [shape: f32[16,16], index: 0, kind: input, shape index: {}]
  %s1 = inlined_call_operand.hbm [shape: f32[16,128], index: 1, kind: input, shape index: {}]
  %s2 = inlined_call_operand.vmem [shape: f32[1,128], index: 2, kind: input, shape index: {}]
  %s3 = inlined_call_operand.hbm [shape: f32[16,128], index: 3, kind: output, shape index: {}]
  %s4 = sld [smem:[#allocation0]]
  $region30: #{tpu_custom_call.1} parent=0
    _
  %s6 = ssub.s32 1, %s4
  %s7 = scalar_select 0, %s6, %s4
  $region1: #{tpu_custom_call.1} parent=0
    #allocation2 [shape = 'u8[8192]{0}', space=vmem, size = 0x2000, scoped, tag = 'input window, operand 0, single buffered']
    #allocation3 [shape = 's32[1]{0}', space=sflag, size = 0x4, scoped, tag = 'scoped memory for tpu_custom_call.1']
    #allocation4 [shape = 's32[1]{0}', space=sflag, size = 0x4, scoped, tag = 'scoped memory for tpu_custom_call.1']
    #allocation5 [shape = 'u8[8192]{0}', space=vmem, size = 0x2000, scoped, tag = 'input window, operand 1, single buffered']
    #allocation6 [shape = 's32[1]{0}', space=sflag, size = 0x4, scoped, tag = 'scoped memory for tpu_custom_call.1']
    #allocation7 [shape = 'u8[8192]{0}', space=vmem, size = 0x2000, scoped, tag = 'output window, operand 0, single buffered']
    %8 = vsyncpa [#allocation3], 0
    %9 = vsyncpa [#allocation6], 0
    %10 = vsyncpa [#allocation4], 0
    // Predicated region
    $region2: #{tpu_custom_call.1} parent=1 // pred_check
      _
    $region3: #{tpu_custom_call.1} parent=1 // pred_check_branch
      %12 = sbr.rel (0) target = $region5
    $region4: #{tpu_custom_call.1} parent=1 // pred_region
      %14 = vsyncadd [#allocation3], 0
      %s15 = sshll.u32 %s0, 4
      %s16 = int_to_ptr.hbm [resolvable:$true] %s15
      %s17 = sshll.u32 [#allocation2], 4
      %s18 = int_to_ptr.vmem [resolvable:$true] %s17
      %23 = dma.hbm_to_vmem [thread:$0]  %s16, 256, %s18, [#allocation3], 128, 128, 8
    $region5: #{tpu_custom_call.1} parent=1 // pred_fallthru
      _
    // Predicated region
    $region6: #{tpu_custom_call.1} parent=1 // pred_check
      _
    $region7: #{tpu_custom_call.1} parent=1 // pred_check_branch
      %25 = sbr.rel (0) target = $region9
    $region8: #{tpu_custom_call.1} parent=1 // pred_region
      %27 = vsyncadd [#allocation6], 0
      %s28 = sshll.u32 %s1, 4
      %s29 = int_to_ptr.hbm [resolvable:$true] %s28
      %s30 = sshll.u32 [#allocation5], 4
      %s31 = int_to_ptr.vmem [resolvable:$true] %s30
      %36 = dma.hbm_to_vmem [thread:$0]  %s29, 256, %s31, [#allocation6], 128, 128, 8
    $region9: #{tpu_custom_call.1} parent=1 // pred_fallthru
      _
    // Predicated region
    $region10: #{tpu_custom_call.1} parent=1 // pred_check
      _
    $region11: #{tpu_custom_call.1} parent=1 // pred_check_branch
      %38 = sbr.rel (0) target = $region13
    $region12: #{tpu_custom_call.1} parent=1 // pred_region
      _
    $region13: #{tpu_custom_call.1} parent=1 // pred_fallthru
      _
    // Predicated region
    $region14: #{tpu_custom_call.1} parent=1 // pred_check
      _
    $region15: #{tpu_custom_call.1} parent=1 // pred_check_branch
      %40 = sbr.rel (0) target = $region17
    $region16: #{tpu_custom_call.1} parent=1 // pred_region
      %42 = dma.done [#allocation3], 256
    $region17: #{tpu_custom_call.1} parent=1 // pred_fallthru
      _
    // Predicated region
    $region18: #{tpu_custom_call.1} parent=1 // pred_check
      _
    $region19: #{tpu_custom_call.1} parent=1 // pred_check_branch
      %44 = sbr.rel (0) target = $region21
    $region20: #{tpu_custom_call.1} parent=1 // pred_region
      %46 = dma.done [#allocation6], 256
    $region21: #{tpu_custom_call.1} parent=1 // pred_fallthru
      _
    %v47 = vld [vmem:[#allocation2] sm:$0xff]
    %v48 = vld [vmem:[#allocation2 + $0x8] sm:$0xff]
    %v49 = vld [vmem:[#allocation5] sm:$0xff]
    %v50 = vld [vmem:[#allocation5 + $0x8] sm:$0xff]
    %v51 = vld [vmem:[%s2] sm:$0x1]
    %v53 = vperm.slane %v51, 0
    %vm55 = vcmask 130048
    %v57 = vsel %vm55, %v47, 0
    %v60 = vsel %vm55, %v48, 0
    %62 = vmatpush.msra.mxu0 0.0
    %63 = vmatpush.msra.mxu0 0.0
    %64 = vmatpush.msra.mxu0 0.0
    %65 = vmatpush.msra.mxu0 0.0
    %66 = vmatpush.msra.mxu0 0.0
    %67 = vmatpush.msra.mxu0 0.0
    %68 = vmatpush.msra.mxu0 0.0
    %69 = vmatpush.msra.mxu0 0.0
    %70 = vmatpush.msra.mxu0 0.0
    %71 = vmatpush.msra.mxu0 0.0
    %72 = vmatpush.msra.mxu0 0.0
    %73 = vmatpush.msra.mxu0 0.0
    %74 = vmatpush.msra.mxu0 0.0
    %75 = vmatpush.msra.mxu0 0.0
    %76 = vmatpush.msra.mxu0 %v50
    %77 = vmatpush.msra.mxu0 %v49
    %78 = vmatmul.f32.gmra.mxu0 %v57
    %v79 = vpop.f32.mrf.mxu0
    %v80 = vadd.f32 %v53, %v79
    %81 = vmatmul.f32.gmra.mxu0 %v60
    %v82 = vpop.f32.mrf.mxu0
    %v83 = vadd.f32 %v53, %v82
    %84 = vdwg.mxu0
    %85 = vst [vmem:[#allocation7] sm:$0xff] %v80
    %86 = vst [vmem:[#allocation7 + $0x8] sm:$0xff] %v83
    // Predicated region
    $region22: #{tpu_custom_call.1} parent=1 // pred_check
      _
    $region23: #{tpu_custom_call.1} parent=1 // pred_check_branch
      %88 = sbr.rel (0) target = $region25
    $region24: #{tpu_custom_call.1} parent=1 // pred_region
      %90 = vsyncadd [#allocation4], 0
      %s91 = sshll.u32 [#allocation7], 4
      %s92 = int_to_ptr.vmem [resolvable:$true] %s91
      %s93 = sshll.u32 %s3, 4
      %s94 = int_to_ptr.hbm [resolvable:$true] %s93
      %99 = dma.vmem_to_hbm [thread:$0]  %s92, 256, %s94, [#allocation4], 128, 128, 8
    $region25: #{tpu_custom_call.1} parent=1 // pred_fallthru
      _
    // Predicated region
    $region26: #{tpu_custom_call.1} parent=1 // pred_check
      _
    $region27: #{tpu_custom_call.1} parent=1 // pred_check_branch
      %101 = sbr.rel (0) target = $region29
    $region28: #{tpu_custom_call.1} parent=1 // pred_region
      %103 = dma.done [#allocation4], 256
    $region29: #{tpu_custom_call.1} parent=1 // pred_fallthru
      _
    %104 = vsyncpa [#allocation3], 1
    %105 = vsyncpa [#allocation6], 1
    %106 = vsyncpa [#allocation4], 1

</llo_original>
